<compile_context>
chip_gen: v5e
topology: v5e:2x2
jax: 0.10.0
libtpu: 0.0.40
codegen_flags: <defaults>
</compile_context>

<pallas_src>
import functools

import jax
import jax.numpy as jnp
from jax.experimental import pallas as pl
from jax.experimental.pallas import tpu as pltpu

SHOTS = 1024                      # matches execute(..., shots=1024)
_SHOT_SUBLANES = SHOTS // 128     # 1024 shots == one (8, 128) int32 vreg


def _qcnn_kernel(meas_ref, wt_ref, b_ref, out_ref, *, num_qubits, num_classes):
    """relu(counts @ W^T + b) where counts[j] = #shots whose bitstring == j."""
    dim = 1 << num_qubits
    measured = meas_ref[...]            # (8, 128) int32, each in [0, 2**n)
    wt = wt_ref[...]                    # (2**n, num_classes) float32 (fc weight, transposed)
    acc = b_ref[...]                    # (1, num_classes) float32, start from the bias

    # Fused histogram + matvec: one compare/reduce + one scale-add per basis state.
    for j in range(dim):                # static unroll; dim is small (e.g. 16)
        cnt_j = jnp.sum((measured == j).astype(jnp.float32), keepdims=True)  # (1, 1)
        acc = acc + cnt_j * wt[j:j + 1, :]                                    # (1, C)

    out_ref[...] = jnp.maximum(acc, 0.0)   # ReLU


def qcnn_forward(x, fc_weight, fc_bias, *, num_qubits, key):
    """Pallas implementation of QCNN.forward.

    `x` is ignored (the reference forward never reads it — do not route feature maps
    here at real call sites). `fc_weight` has the torch Linear layout
    (num_classes, 2**num_qubits), `fc_bias` is (num_classes,). Returns a
    (num_classes,) float32 vector = relu(fc(measurement_counts)).
    """
    del x  # reference forward ignores its input
    assert 0 < num_qubits <= 8, "num_qubits must be in (0, 8] for the unrolled histogram"
    dim = 1 << num_qubits
    num_classes, in_features = fc_weight.shape
    assert in_features == dim, (fc_weight.shape, dim)

    # Post-Hadamard measurement: each of the 1024 shots is uniform over 2**n outcomes.
    # TODO(synk): same distribution as Qiskit's qasm_simulator, different RNG stream.
    measured = jax.random.randint(
        key, (_SHOT_SUBLANES, 128), 0, dim, dtype=jnp.int32)

    wt = fc_weight.T.astype(jnp.float32)                       # (2**n, C)
    b2d = fc_bias.astype(jnp.float32).reshape(1, num_classes)  # (1, C)

    kernel = functools.partial(
        _qcnn_kernel, num_qubits=num_qubits, num_classes=num_classes)

    out = pl.pallas_call(
        kernel,
        out_shape=jax.ShapeDtypeStruct((1, num_classes), jnp.float32),
        in_specs=[
            pl.BlockSpec(memory_space=pltpu.MemorySpace.VMEM),  # measured shots
            pl.BlockSpec(memory_space=pltpu.MemorySpace.VMEM),  # W^T
            pl.BlockSpec(memory_space=pltpu.MemorySpace.VMEM),  # bias
        ],
        out_specs=pl.BlockSpec(memory_space=pltpu.MemorySpace.VMEM),
    )(measured, wt, b2d)

    # Torch returns a 1-D (num_classes,) vector for the 1-D count input.
    return out.reshape((num_classes,))


if __name__ == "__main__":
    key = jax.random.PRNGKey(0)
    k_x, k_w, k_b, k_shots = jax.random.split(key, 4)

    num_qubits = 4      # 2**4 = 16 basis states; expected zero-count ~ 1024/16 = 64
    num_classes = 3

    # Example NCHW feature map consistent with the surrounding conv network; the
    # reference forward ignores it entirely.
    x = jax.random.normal(k_x, (2, 4, 16, 16), dtype=jnp.float32)
    fc_weight = 0.05 * jax.random.normal(
        k_w, (num_classes, 2 ** num_qubits), dtype=jnp.float32)
    fc_bias = jax.random.normal(k_b, (num_classes,), dtype=jnp.float32)

    out = qcnn_forward(x, fc_weight, fc_bias, num_qubits=num_qubits, key=k_shots)
    out = jax.block_until_ready(out)

    assert out.shape == (num_classes,), out.shape
    assert bool(jnp.all(out >= 0.0)), out          # ReLU output is non-negative
    assert bool(jnp.all(jnp.isfinite(out))), out
    print("KERNEL_OK")
</pallas_src>

<mosaic_0001>
module attributes {stable_mosaic.version = 11 : i64} {
  func.func @_qcnn_kernel(%arg0: memref<8x128xi32, #tpu.memory_space<vmem>>, %arg1: memref<16x3xf32, #tpu.memory_space<vmem>>, %arg2: memref<1x3xf32, #tpu.memory_space<vmem>>, %arg3: memref<1x3xf32, #tpu.memory_space<vmem>>) attributes {dimension_semantics = [], scalar_prefetch = 0 : i64, scratch_operands = 0 : i64, tpu.core_type = #tpu.core_type<tc>} {
    %c0 = arith.constant 0 : index
    %c0_0 = arith.constant 0 : index
    %0 = vector.load %arg0[%c0, %c0_0] : memref<8x128xi32, #tpu.memory_space<vmem>>, vector<8x128xi32>
    %c0_1 = arith.constant 0 : index
    %c0_2 = arith.constant 0 : index
    %1 = vector.load %arg1[%c0_1, %c0_2] : memref<16x3xf32, #tpu.memory_space<vmem>>, vector<16x3xf32>
    %c0_3 = arith.constant 0 : index
    %c0_4 = arith.constant 0 : index
    %2 = vector.load %arg2[%c0_3, %c0_4] : memref<1x3xf32, #tpu.memory_space<vmem>>, vector<1x3xf32>
    %c0_i32 = arith.constant 0 : i32
    %3 = vector.broadcast %c0_i32 : i32 to vector<8x128xi32>
    %4 = arith.cmpi eq, %0, %3 : vector<8x128xi32>
    %5 = arith.extui %4 : vector<8x128xi1> to vector<8x128xi32>
    %6 = arith.sitofp %5 : vector<8x128xi32> to vector<8x128xf32>
    %7 = vector.shape_cast %6 : vector<8x128xf32> to vector<1x8x128xf32>
    %cst = arith.constant dense<0.000000e+00> : vector<1xf32>
    %8 = vector.multi_reduction <add>, %7, %cst [1, 2] : vector<1x8x128xf32> to vector<1xf32>
    %9 = vector.shape_cast %8 : vector<1xf32> to vector<1x1x1xf32>
    %10 = vector.extract %9[0, 0, 0] : f32 from vector<1x1x1xf32>
    %11 = vector.broadcast %10 : f32 to vector<1x1xf32>
    %12 = vector.extract_strided_slice %1 {offsets = [0, 0], sizes = [1, 3], strides = [1, 1]} : vector<16x3xf32> to vector<1x3xf32>
    %13 = vector.broadcast %11 : vector<1x1xf32> to vector<1x3xf32>
    %14 = arith.mulf %13, %12 : vector<1x3xf32>
    %15 = arith.addf %2, %14 : vector<1x3xf32>
    %c1_i32 = arith.constant 1 : i32
    %16 = vector.broadcast %c1_i32 : i32 to vector<8x128xi32>
    %17 = arith.cmpi eq, %0, %16 : vector<8x128xi32>
    %18 = arith.extui %17 : vector<8x128xi1> to vector<8x128xi32>
    %19 = arith.sitofp %18 : vector<8x128xi32> to vector<8x128xf32>
    %20 = vector.shape_cast %19 : vector<8x128xf32> to vector<1x8x128xf32>
    %cst_5 = arith.constant dense<0.000000e+00> : vector<1xf32>
    %21 = vector.multi_reduction <add>, %20, %cst_5 [1, 2] : vector<1x8x128xf32> to vector<1xf32>
    %22 = vector.shape_cast %21 : vector<1xf32> to vector<1x1x1xf32>
    %23 = vector.extract %22[0, 0, 0] : f32 from vector<1x1x1xf32>
    %24 = vector.broadcast %23 : f32 to vector<1x1xf32>
    %25 = vector.extract_strided_slice %1 {offsets = [1, 0], sizes = [1, 3], strides = [1, 1]} : vector<16x3xf32> to vector<1x3xf32>
    %26 = vector.broadcast %24 : vector<1x1xf32> to vector<1x3xf32>
    %27 = arith.mulf %26, %25 : vector<1x3xf32>
    %28 = arith.addf %15, %27 : vector<1x3xf32>
    %c2_i32 = arith.constant 2 : i32
    %29 = vector.broadcast %c2_i32 : i32 to vector<8x128xi32>
    %30 = arith.cmpi eq, %0, %29 : vector<8x128xi32>
    %31 = arith.extui %30 : vector<8x128xi1> to vector<8x128xi32>
    %32 = arith.sitofp %31 : vector<8x128xi32> to vector<8x128xf32>
    %33 = vector.shape_cast %32 : vector<8x128xf32> to vector<1x8x128xf32>
    %cst_6 = arith.constant dense<0.000000e+00> : vector<1xf32>
    %34 = vector.multi_reduction <add>, %33, %cst_6 [1, 2] : vector<1x8x128xf32> to vector<1xf32>
    %35 = vector.shape_cast %34 : vector<1xf32> to vector<1x1x1xf32>
    %36 = vector.extract %35[0, 0, 0] : f32 from vector<1x1x1xf32>
    %37 = vector.broadcast %36 : f32 to vector<1x1xf32>
    %38 = vector.extract_strided_slice %1 {offsets = [2, 0], sizes = [1, 3], strides = [1, 1]} : vector<16x3xf32> to vector<1x3xf32>
    %39 = vector.broadcast %37 : vector<1x1xf32> to vector<1x3xf32>
    %40 = arith.mulf %39, %38 : vector<1x3xf32>
    %41 = arith.addf %28, %40 : vector<1x3xf32>
    %c3_i32 = arith.constant 3 : i32
    %42 = vector.broadcast %c3_i32 : i32 to vector<8x128xi32>
    %43 = arith.cmpi eq, %0, %42 : vector<8x128xi32>
    %44 = arith.extui %43 : vector<8x128xi1> to vector<8x128xi32>
    %45 = arith.sitofp %44 : vector<8x128xi32> to vector<8x128xf32>
    %46 = vector.shape_cast %45 : vector<8x128xf32> to vector<1x8x128xf32>
    %cst_7 = arith.constant dense<0.000000e+00> : vector<1xf32>
    %47 = vector.multi_reduction <add>, %46, %cst_7 [1, 2] : vector<1x8x128xf32> to vector<1xf32>
    %48 = vector.shape_cast %47 : vector<1xf32> to vector<1x1x1xf32>
    %49 = vector.extract %48[0, 0, 0] : f32 from vector<1x1x1xf32>
    %50 = vector.broadcast %49 : f32 to vector<1x1xf32>
    %51 = vector.extract_strided_slice %1 {offsets = [3, 0], sizes = [1, 3], strides = [1, 1]} : vector<16x3xf32> to vector<1x3xf32>
    %52 = vector.broadcast %50 : vector<1x1xf32> to vector<1x3xf32>
    %53 = arith.mulf %52, %51 : vector<1x3xf32>
    %54 = arith.addf %41, %53 : vector<1x3xf32>
    %c4_i32 = arith.constant 4 : i32
    %55 = vector.broadcast %c4_i32 : i32 to vector<8x128xi32>
    %56 = arith.cmpi eq, %0, %55 : vector<8x128xi32>
    %57 = arith.extui %56 : vector<8x128xi1> to vector<8x128xi32>
    %58 = arith.sitofp %57 : vector<8x128xi32> to vector<8x128xf32>
    %59 = vector.shape_cast %58 : vector<8x128xf32> to vector<1x8x128xf32>
    %cst_8 = arith.constant dense<0.000000e+00> : vector<1xf32>
    %60 = vector.multi_reduction <add>, %59, %cst_8 [1, 2] : vector<1x8x128xf32> to vector<1xf32>
    %61 = vector.shape_cast %60 : vector<1xf32> to vector<1x1x1xf32>
    %62 = vector.extract %61[0, 0, 0] : f32 from vector<1x1x1xf32>
    %63 = vector.broadcast %62 : f32 to vector<1x1xf32>
    %64 = vector.extract_strided_slice %1 {offsets = [4, 0], sizes = [1, 3], strides = [1, 1]} : vector<16x3xf32> to vector<1x3xf32>
    %65 = vector.broadcast %63 : vector<1x1xf32> to vector<1x3xf32>
    %66 = arith.mulf %65, %64 : vector<1x3xf32>
    %67 = arith.addf %54, %66 : vector<1x3xf32>
    %c5_i32 = arith.constant 5 : i32
    %68 = vector.broadcast %c5_i32 : i32 to vector<8x128xi32>
    %69 = arith.cmpi eq, %0, %68 : vector<8x128xi32>
    %70 = arith.extui %69 : vector<8x128xi1> to vector<8x128xi32>
    %71 = arith.sitofp %70 : vector<8x128xi32> to vector<8x128xf32>
    %72 = vector.shape_cast %71 : vector<8x128xf32> to vector<1x8x128xf32>
    %cst_9 = arith.constant dense<0.000000e+00> : vector<1xf32>
    %73 = vector.multi_reduction <add>, %72, %cst_9 [1, 2] : vector<1x8x128xf32> to vector<1xf32>
    %74 = vector.shape_cast %73 : vector<1xf32> to vector<1x1x1xf32>
    %75 = vector.extract %74[0, 0, 0] : f32 from vector<1x1x1xf32>
    %76 = vector.broadcast %75 : f32 to vector<1x1xf32>
    %77 = vector.extract_strided_slice %1 {offsets = [5, 0], sizes = [1, 3], strides = [1, 1]} : vector<16x3xf32> to vector<1x3xf32>
    %78 = vector.broadcast %76 : vector<1x1xf32> to vector<1x3xf32>
    %79 = arith.mulf %78, %77 : vector<1x3xf32>
    %80 = arith.addf %67, %79 : vector<1x3xf32>
    %c6_i32 = arith.constant 6 : i32
    %81 = vector.broadcast %c6_i32 : i32 to vector<8x128xi32>
    %82 = arith.cmpi eq, %0, %81 : vector<8x128xi32>
    %83 = arith.extui %82 : vector<8x128xi1> to vector<8x128xi32>
    %84 = arith.sitofp %83 : vector<8x128xi32> to vector<8x128xf32>
    %85 = vector.shape_cast %84 : vector<8x128xf32> to vector<1x8x128xf32>
    %cst_10 = arith.constant dense<0.000000e+00> : vector<1xf32>
    %86 = vector.multi_reduction <add>, %85, %cst_10 [1, 2] : vector<1x8x128xf32> to vector<1xf32>
    %87 = vector.shape_cast %86 : vector<1xf32> to vector<1x1x1xf32>
    %88 = vector.extract %87[0, 0, 0] : f32 from vector<1x1x1xf32>
    %89 = vector.broadcast %88 : f32 to vector<1x1xf32>
    %90 = vector.extract_strided_slice %1 {offsets = [6, 0], sizes = [1, 3], strides = [1, 1]} : vector<16x3xf32> to vector<1x3xf32>
    %91 = vector.broadcast %89 : vector<1x1xf32> to vector<1x3xf32>
    %92 = arith.mulf %91, %90 : vector<1x3xf32>
    %93 = arith.addf %80, %92 : vector<1x3xf32>
    %c7_i32 = arith.constant 7 : i32
    %94 = vector.broadcast %c7_i32 : i32 to vector<8x128xi32>
    %95 = arith.cmpi eq, %0, %94 : vector<8x128xi32>
    %96 = arith.extui %95 : vector<8x128xi1> to vector<8x128xi32>
    %97 = arith.sitofp %96 : vector<8x128xi32> to vector<8x128xf32>
    %98 = vector.shape_cast %97 : vector<8x128xf32> to vector<1x8x128xf32>
    %cst_11 = arith.constant dense<0.000000e+00> : vector<1xf32>
    %99 = vector.multi_reduction <add>, %98, %cst_11 [1, 2] : vector<1x8x128xf32> to vector<1xf32>
    %100 = vector.shape_cast %99 : vector<1xf32> to vector<1x1x1xf32>
    %101 = vector.extract %100[0, 0, 0] : f32 from vector<1x1x1xf32>
    %102 = vector.broadcast %101 : f32 to vector<1x1xf32>
    %103 = vector.extract_strided_slice %1 {offsets = [7, 0], sizes = [1, 3], strides = [1, 1]} : vector<16x3xf32> to vector<1x3xf32>
    %104 = vector.broadcast %102 : vector<1x1xf32> to vector<1x3xf32>
    %105 = arith.mulf %104, %103 : vector<1x3xf32>
    %106 = arith.addf %93, %105 : vector<1x3xf32>
    %c8_i32 = arith.constant 8 : i32
    %107 = vector.broadcast %c8_i32 : i32 to vector<8x128xi32>
    %108 = arith.cmpi eq, %0, %107 : vector<8x128xi32>
    %109 = arith.extui %108 : vector<8x128xi1> to vector<8x128xi32>
    %110 = arith.sitofp %109 : vector<8x128xi32> to vector<8x128xf32>
    %111 = vector.shape_cast %110 : vector<8x128xf32> to vector<1x8x128xf32>
    %cst_12 = arith.constant dense<0.000000e+00> : vector<1xf32>
    %112 = vector.multi_reduction <add>, %111, %cst_12 [1, 2] : vector<1x8x128xf32> to vector<1xf32>
    %113 = vector.shape_cast %112 : vector<1xf32> to vector<1x1x1xf32>
    %114 = vector.extract %113[0, 0, 0] : f32 from vector<1x1x1xf32>
    %115 = vector.broadcast %114 : f32 to vector<1x1xf32>
    %116 = vector.extract_strided_slice %1 {offsets = [8, 0], sizes = [1, 3], strides = [1, 1]} : vector<16x3xf32> to vector<1x3xf32>
    %117 = vector.broadcast %115 : vector<1x1xf32> to vector<1x3xf32>
    %118 = arith.mulf %117, %116 : vector<1x3xf32>
    %119 = arith.addf %106, %118 : vector<1x3xf32>
    %c9_i32 = arith.constant 9 : i32
    %120 = vector.broadcast %c9_i32 : i32 to vector<8x128xi32>
    %121 = arith.cmpi eq, %0, %120 : vector<8x128xi32>
    %122 = arith.extui %121 : vector<8x128xi1> to vector<8x128xi32>
    %123 = arith.sitofp %122 : vector<8x128xi32> to vector<8x128xf32>
    %124 = vector.shape_cast %123 : vector<8x128xf32> to vector<1x8x128xf32>
    %cst_13 = arith.constant dense<0.000000e+00> : vector<1xf32>
    %125 = vector.multi_reduction <add>, %124, %cst_13 [1, 2] : vector<1x8x128xf32> to vector<1xf32>
    %126 = vector.shape_cast %125 : vector<1xf32> to vector<1x1x1xf32>
    %127 = vector.extract %126[0, 0, 0] : f32 from vector<1x1x1xf32>
    %128 = vector.broadcast %127 : f32 to vector<1x1xf32>
    %129 = vector.extract_strided_slice %1 {offsets = [9, 0], sizes = [1, 3], strides = [1, 1]} : vector<16x3xf32> to vector<1x3xf32>
    %130 = vector.broadcast %128 : vector<1x1xf32> to vector<1x3xf32>
    %131 = arith.mulf %130, %129 : vector<1x3xf32>
    %132 = arith.addf %119, %131 : vector<1x3xf32>
    %c10_i32 = arith.constant 10 : i32
    %133 = vector.broadcast %c10_i32 : i32 to vector<8x128xi32>
    %134 = arith.cmpi eq, %0, %133 : vector<8x128xi32>
    %135 = arith.extui %134 : vector<8x128xi1> to vector<8x128xi32>
    %136 = arith.sitofp %135 : vector<8x128xi32> to vector<8x128xf32>
    %137 = vector.shape_cast %136 : vector<8x128xf32> to vector<1x8x128xf32>
    %cst_14 = arith.constant dense<0.000000e+00> : vector<1xf32>
    %138 = vector.multi_reduction <add>, %137, %cst_14 [1, 2] : vector<1x8x128xf32> to vector<1xf32>
    %139 = vector.shape_cast %138 : vector<1xf32> to vector<1x1x1xf32>
    %140 = vector.extract %139[0, 0, 0] : f32 from vector<1x1x1xf32>
    %141 = vector.broadcast %140 : f32 to vector<1x1xf32>
    %142 = vector.extract_strided_slice %1 {offsets = [10, 0], sizes = [1, 3], strides = [1, 1]} : vector<16x3xf32> to vector<1x3xf32>
    %143 = vector.broadcast %141 : vector<1x1xf32> to vector<1x3xf32>
    %144 = arith.mulf %143, %142 : vector<1x3xf32>
    %145 = arith.addf %132, %144 : vector<1x3xf32>
    %c11_i32 = arith.constant 11 : i32
    %146 = vector.broadcast %c11_i32 : i32 to vector<8x128xi32>
    %147 = arith.cmpi eq, %0, %146 : vector<8x128xi32>
    %148 = arith.extui %147 : vector<8x128xi1> to vector<8x128xi32>
    %149 = arith.sitofp %148 : vector<8x128xi32> to vector<8x128xf32>
    %150 = vector.shape_cast %149 : vector<8x128xf32> to vector<1x8x128xf32>
    %cst_15 = arith.constant dense<0.000000e+00> : vector<1xf32>
    %151 = vector.multi_reduction <add>, %150, %cst_15 [1, 2] : vector<1x8x128xf32> to vector<1xf32>
    %152 = vector.shape_cast %151 : vector<1xf32> to vector<1x1x1xf32>
    %153 = vector.extract %152[0, 0, 0] : f32 from vector<1x1x1xf32>
    %154 = vector.broadcast %153 : f32 to vector<1x1xf32>
    %155 = vector.extract_strided_slice %1 {offsets = [11, 0], sizes = [1, 3], strides = [1, 1]} : vector<16x3xf32> to vector<1x3xf32>
    %156 = vector.broadcast %154 : vector<1x1xf32> to vector<1x3xf32>
    %157 = arith.mulf %156, %155 : vector<1x3xf32>
    %158 = arith.addf %145, %157 : vector<1x3xf32>
    %c12_i32 = arith.constant 12 : i32
    %159 = vector.broadcast %c12_i32 : i32 to vector<8x128xi32>
    %160 = arith.cmpi eq, %0, %159 : vector<8x128xi32>
    %161 = arith.extui %160 : vector<8x128xi1> to vector<8x128xi32>
    %162 = arith.sitofp %161 : vector<8x128xi32> to vector<8x128xf32>
    %163 = vector.shape_cast %162 : vector<8x128xf32> to vector<1x8x128xf32>
    %cst_16 = arith.constant dense<0.000000e+00> : vector<1xf32>
    %164 = vector.multi_reduction <add>, %163, %cst_16 [1, 2] : vector<1x8x128xf32> to vector<1xf32>
    %165 = vector.shape_cast %164 : vector<1xf32> to vector<1x1x1xf32>
    %166 = vector.extract %165[0, 0, 0] : f32 from vector<1x1x1xf32>
    %167 = vector.broadcast %166 : f32 to vector<1x1xf32>
    %168 = vector.extract_strided_slice %1 {offsets = [12, 0], sizes = [1, 3], strides = [1, 1]} : vector<16x3xf32> to vector<1x3xf32>
    %169 = vector.broadcast %167 : vector<1x1xf32> to vector<1x3xf32>
    %170 = arith.mulf %169, %168 : vector<1x3xf32>
    %171 = arith.addf %158, %170 : vector<1x3xf32>
    %c13_i32 = arith.constant 13 : i32
    %172 = vector.broadcast %c13_i32 : i32 to vector<8x128xi32>
    %173 = arith.cmpi eq, %0, %172 : vector<8x128xi32>
    %174 = arith.extui %173 : vector<8x128xi1> to vector<8x128xi32>
    %175 = arith.sitofp %174 : vector<8x128xi32> to vector<8x128xf32>
    %176 = vector.shape_cast %175 : vector<8x128xf32> to vector<1x8x128xf32>
    %cst_17 = arith.constant dense<0.000000e+00> : vector<1xf32>
    %177 = vector.multi_reduction <add>, %176, %cst_17 [1, 2] : vector<1x8x128xf32> to vector<1xf32>
    %178 = vector.shape_cast %177 : vector<1xf32> to vector<1x1x1xf32>
    %179 = vector.extract %178[0, 0, 0] : f32 from vector<1x1x1xf32>
    %180 = vector.broadcast %179 : f32 to vector<1x1xf32>
    %181 = vector.extract_strided_slice %1 {offsets = [13, 0], sizes = [1, 3], strides = [1, 1]} : vector<16x3xf32> to vector<1x3xf32>
    %182 = vector.broadcast %180 : vector<1x1xf32> to vector<1x3xf32>
    %183 = arith.mulf %182, %181 : vector<1x3xf32>
    %184 = arith.addf %171, %183 : vector<1x3xf32>
    %c14_i32 = arith.constant 14 : i32
    %185 = vector.broadcast %c14_i32 : i32 to vector<8x128xi32>
    %186 = arith.cmpi eq, %0, %185 : vector<8x128xi32>
    %187 = arith.extui %186 : vector<8x128xi1> to vector<8x128xi32>
    %188 = arith.sitofp %187 : vector<8x128xi32> to vector<8x128xf32>
    %189 = vector.shape_cast %188 : vector<8x128xf32> to vector<1x8x128xf32>
    %cst_18 = arith.constant dense<0.000000e+00> : vector<1xf32>
    %190 = vector.multi_reduction <add>, %189, %cst_18 [1, 2] : vector<1x8x128xf32> to vector<1xf32>
    %191 = vector.shape_cast %190 : vector<1xf32> to vector<1x1x1xf32>
    %192 = vector.extract %191[0, 0, 0] : f32 from vector<1x1x1xf32>
    %193 = vector.broadcast %192 : f32 to vector<1x1xf32>
    %194 = vector.extract_strided_slice %1 {offsets = [14, 0], sizes = [1, 3], strides = [1, 1]} : vector<16x3xf32> to vector<1x3xf32>
    %195 = vector.broadcast %193 : vector<1x1xf32> to vector<1x3xf32>
    %196 = arith.mulf %195, %194 : vector<1x3xf32>
    %197 = arith.addf %184, %196 : vector<1x3xf32>
    %c15_i32 = arith.constant 15 : i32
    %198 = vector.broadcast %c15_i32 : i32 to vector<8x128xi32>
    %199 = arith.cmpi eq, %0, %198 : vector<8x128xi32>
    %200 = arith.extui %199 : vector<8x128xi1> to vector<8x128xi32>
    %201 = arith.sitofp %200 : vector<8x128xi32> to vector<8x128xf32>
    %202 = vector.shape_cast %201 : vector<8x128xf32> to vector<1x8x128xf32>
    %cst_19 = arith.constant dense<0.000000e+00> : vector<1xf32>
    %203 = vector.multi_reduction <add>, %202, %cst_19 [1, 2] : vector<1x8x128xf32> to vector<1xf32>
    %204 = vector.shape_cast %203 : vector<1xf32> to vector<1x1x1xf32>
    %205 = vector.extract %204[0, 0, 0] : f32 from vector<1x1x1xf32>
    %206 = vector.broadcast %205 : f32 to vector<1x1xf32>
    %207 = vector.extract_strided_slice %1 {offsets = [15, 0], sizes = [1, 3], strides = [1, 1]} : vector<16x3xf32> to vector<1x3xf32>
    %208 = vector.broadcast %206 : vector<1x1xf32> to vector<1x3xf32>
    %209 = arith.mulf %208, %207 : vector<1x3xf32>
    %210 = arith.addf %197, %209 : vector<1x3xf32>
    %cst_20 = arith.constant 0.000000e+00 : f32
    %211 = vector.broadcast %cst_20 : f32 to vector<1x3xf32>
    %212 = arith.maximumf %210, %211 : vector<1x3xf32>
    %c0_21 = arith.constant 0 : index
    %c0_22 = arith.constant 0 : index
    %213 = vector.load %arg3[%c0_21, %c0_22] : memref<1x3xf32, #tpu.memory_space<vmem>>, vector<1x3xf32>
    tpu.vector_store %arg3[%c0_21, %c0_22], %212 {strides = array<i32>} : memref<1x3xf32, #tpu.memory_space<vmem>>, vector<1x3xf32>,
    return
  }
}

</mosaic_0001>

<llo_original>
// kernel: tpu_custom_call.1
$region0: #{tpu_custom_call.1}
  #allocation0 [shape = 'u32[]', space=smem, size = 0x4, offset = 0x4, fixed_abs, tag = 'smem constant byte address 0x4 - core index']
  #allocation1 [shape = 'u32[72,128]{1,0:T(1,128)}', space=vmem, size = 0x9000, scoped, tag = 'internal scratch']
  %s0 = inlined_call_operand.vmem [shape: s32[8,128], index: 0, kind: input, shape index: {}]
  %s1 = inlined_call_operand.vmem [shape: f32[16,3], index: 1, kind: input, shape index: {}]
  %s2 = inlined_call_operand.vmem [shape: f32[1,3], index: 2, kind: input, shape index: {}]
  %s3 = inlined_call_operand.hbm [shape: f32[1,3], index: 3, kind: output, shape index: {}]
  %s4 = sld [smem:[#allocation0]]
  $region22: #{tpu_custom_call.1} parent=0
    _
  %s6 = ssub.s32 1, %s4
  %s7 = scalar_select 0, %s6, %s4
  $region1: #{tpu_custom_call.1} parent=0
    #allocation2 [shape = 'u8[512]{0}', space=vmem, size = 0x400, scoped, tag = 'output window, operand 0, single buffered']
    #allocation3 [shape = 's32[1]{0}', space=sflag, size = 0x4, scoped, tag = 'scoped memory for tpu_custom_call.1']
    %8 = vsyncpa [#allocation3], 0
    // Predicated region
    $region2: #{tpu_custom_call.1} parent=1 // pred_check
      _
    $region3: #{tpu_custom_call.1} parent=1 // pred_check_branch
      %10 = sbr.rel (0) target = $region5
    $region4: #{tpu_custom_call.1} parent=1 // pred_region
      _
    $region5: #{tpu_custom_call.1} parent=1 // pred_fallthru
      _
    // Predicated region
    $region6: #{tpu_custom_call.1} parent=1 // pred_check
      _
    $region7: #{tpu_custom_call.1} parent=1 // pred_check_branch
      %12 = sbr.rel (0) target = $region9
    $region8: #{tpu_custom_call.1} parent=1 // pred_region
      _
    $region9: #{tpu_custom_call.1} parent=1 // pred_fallthru
      _
    // Predicated region
    $region10: #{tpu_custom_call.1} parent=1 // pred_check
      _
    $region11: #{tpu_custom_call.1} parent=1 // pred_check_branch
      %14 = sbr.rel (0) target = $region13
    $region12: #{tpu_custom_call.1} parent=1 // pred_region
      _
    $region13: #{tpu_custom_call.1} parent=1 // pred_fallthru
      _
    %v15 = vld [vmem:[%s0] sm:$0xff]
    %v16 = vld [vmem:[%s1] sm:$0xff]
    %v17 = vld [vmem:[%s1 + $0x8] sm:$0xff]
    %v18 = vld [vmem:[%s2] sm:$0x1]
    %vm19 = vcmp.eq.s32.totalorder %v15, 0
    %v20 = vsel %vm19, 1, 0
    %v21 = vcvt.s32.f32 %v20
    %22 = vadd.xlane.f32.xlu0 %v21
    %v23 = vpop.xlane.xlu0 %22
    %v24 = vrot.slane %v23, 4
    %v25 = vadd.f32 %v23, %v24
    %v26 = vrot.slane %v25, 2
    %v27 = vadd.f32 %v25, %v26
    %v28 = vrot.slane %v27, 1
    %v29 = vadd.f32 %v27, %v28
    %s30 = vtos %v29
    %v31 = vstv %s30
    %v32 = vmul.f32 %v31, %v16
    %v33 = vadd.f32 %v18, %v32
    %vm34 = vcmp.eq.s32.totalorder %v15, 1
    %v35 = vsel %vm34, 1, 0
    %v36 = vcvt.s32.f32 %v35
    %37 = vadd.xlane.f32.xlu0 %v36
    %v38 = vpop.xlane.xlu0 %37
    %v39 = vrot.slane %v38, 4
    %v40 = vadd.f32 %v38, %v39
    %v41 = vrot.slane %v40, 2
    %v42 = vadd.f32 %v40, %v41
    %v43 = vrot.slane %v42, 1
    %v44 = vadd.f32 %v42, %v43
    %s45 = vtos %v44
    %v46 = vstv %s45
    %v47 = vmul.f32 %v46, %v16
    %49 = vst [vmem:[#allocation1] sm:$0xff] %v47
    %s50 = scalar_lea.vmem [#allocation1], 1
    %v51 = vld [vmem:[%s50] ss:$9 sm:$0xff]
    %v53 = vadd.f32 %v33, %v51
    %vm54 = vcmp.eq.s32.totalorder %v15, 2
    %v55 = vsel %vm54, 1, 0
    %v56 = vcvt.s32.f32 %v55
    %57 = vadd.xlane.f32.xlu0 %v56
    %v58 = vpop.xlane.xlu0 %57
    %v59 = vrot.slane %v58, 4
    %v60 = vadd.f32 %v58, %v59
    %v61 = vrot.slane %v60, 2
    %v62 = vadd.f32 %v60, %v61
    %v63 = vrot.slane %v62, 1
    %v64 = vadd.f32 %v62, %v63
    %s65 = vtos %v64
    %v66 = vstv %s65
    %v67 = vmul.f32 %v66, %v16
    %69 = vst [vmem:[#allocation1] sm:$0xff] %v67
    %s70 = scalar_lea.vmem [#allocation1], 2
    %v71 = vld [vmem:[%s70] ss:$9 sm:$0xff]
    %v73 = vadd.f32 %v53, %v71
    %vm74 = vcmp.eq.s32.totalorder %v15, 3
    %v75 = vsel %vm74, 1, 0
    %v76 = vcvt.s32.f32 %v75
    %77 = vadd.xlane.f32.xlu0 %v76
    %v78 = vpop.xlane.xlu0 %77
    %v79 = vrot.slane %v78, 4
    %v80 = vadd.f32 %v78, %v79
    %v81 = vrot.slane %v80, 2
    %v82 = vadd.f32 %v80, %v81
    %v83 = vrot.slane %v82, 1
    %v84 = vadd.f32 %v82, %v83
    %s85 = vtos %v84
    %v86 = vstv %s85
    %v87 = vmul.f32 %v86, %v16
    %89 = vst [vmem:[#allocation1] sm:$0xff] %v87
    %s90 = scalar_lea.vmem [#allocation1], 3
    %v91 = vld [vmem:[%s90] ss:$9 sm:$0xff]
    %v93 = vadd.f32 %v73, %v91
    %vm94 = vcmp.eq.s32.totalorder %v15, 4
    %v95 = vsel %vm94, 1, 0
    %v96 = vcvt.s32.f32 %v95
    %97 = vadd.xlane.f32.xlu0 %v96
    %v98 = vpop.xlane.xlu0 %97
    %v99 = vrot.slane %v98, 4
    %v100 = vadd.f32 %v98, %v99
    %v101 = vrot.slane %v100, 2
    %v102 = vadd.f32 %v100, %v101
    %v103 = vrot.slane %v102, 1
    %v104 = vadd.f32 %v102, %v103
    %s105 = vtos %v104
    %v106 = vstv %s105
    %v107 = vmul.f32 %v106, %v16
    %109 = vst [vmem:[#allocation1] sm:$0xff] %v107
    %s110 = scalar_lea.vmem [#allocation1], 4
    %v111 = vld [vmem:[%s110] ss:$9 sm:$0xff]
    %v113 = vadd.f32 %v93, %v111
    %vm114 = vcmp.eq.s32.totalorder %v15, 5
    %v115 = vsel %vm114, 1, 0
    %v116 = vcvt.s32.f32 %v115
    %117 = vadd.xlane.f32.xlu0 %v116
    %v118 = vpop.xlane.xlu0 %117
    %v119 = vrot.slane %v118, 4
    %v120 = vadd.f32 %v118, %v119
    %v121 = vrot.slane %v120, 2
    %v122 = vadd.f32 %v120, %v121
    %v123 = vrot.slane %v122, 1
    %v124 = vadd.f32 %v122, %v123
    %s125 = vtos %v124
    %v126 = vstv %s125
    %v127 = vmul.f32 %v126, %v16
    %129 = vst [vmem:[#allocation1] sm:$0xff] %v127
    %s130 = scalar_lea.vmem [#allocation1], 5
    %v131 = vld [vmem:[%s130] ss:$9 sm:$0xff]
    %v133 = vadd.f32 %v113, %v131
    %vm134 = vcmp.eq.s32.totalorder %v15, 6
    %v135 = vsel %vm134, 1, 0
    %v136 = vcvt.s32.f32 %v135
    %137 = vadd.xlane.f32.xlu0 %v136
    %v138 = vpop.xlane.xlu0 %137
    %v139 = vrot.slane %v138, 4
    %v140 = vadd.f32 %v138, %v139
    %v141 = vrot.slane %v140, 2
    %v142 = vadd.f32 %v140, %v141
    %v143 = vrot.slane %v142, 1
    %v144 = vadd.f32 %v142, %v143
    %s145 = vtos %v144
    %v146 = vstv %s145
    %v147 = vmul.f32 %v146, %v16
    %149 = vst [vmem:[#allocation1] sm:$0xff] %v147
    %s150 = scalar_lea.vmem [#allocation1], 6
    %v151 = vld [vmem:[%s150] ss:$9 sm:$0xff]
    %v153 = vadd.f32 %v133, %v151
    %vm154 = vcmp.eq.s32.totalorder %v15, 7
    %v155 = vsel %vm154, 1, 0
    %v156 = vcvt.s32.f32 %v155
    %157 = vadd.xlane.f32.xlu0 %v156
    %v158 = vpop.xlane.xlu0 %157
    %v159 = vrot.slane %v158, 4
    %v160 = vadd.f32 %v158, %v159
    %v161 = vrot.slane %v160, 2
    %v162 = vadd.f32 %v160, %v161
    %v163 = vrot.slane %v162, 1
    %v164 = vadd.f32 %v162, %v163
    %s165 = vtos %v164
    %v166 = vstv %s165
    %v167 = vmul.f32 %v166, %v16
    %169 = vst [vmem:[#allocation1] sm:$0xff] %v167
    %s170 = scalar_lea.vmem [#allocation1], 7
    %v171 = vld [vmem:[%s170] ss:$9 sm:$0xff]
    %v173 = vadd.f32 %v153, %v171
    %vm174 = vcmp.eq.s32.totalorder %v15, 8
    %v175 = vsel %vm174, 1, 0
    %v176 = vcvt.s32.f32 %v175
    %177 = vadd.xlane.f32.xlu0 %v176
    %v178 = vpop.xlane.xlu0 %177
    %v179 = vrot.slane %v178, 4
    %v180 = vadd.f32 %v178, %v179
    %v181 = vrot.slane %v180, 2
    %v182 = vadd.f32 %v180, %v181
    %v183 = vrot.slane %v182, 1
    %v184 = vadd.f32 %v182, %v183
    %s185 = vtos %v184
    %v186 = vstv %s185
    %v187 = vmul.f32 %v186, %v17
    %v188 = vadd.f32 %v173, %v187
    %vm189 = vcmp.eq.s32.totalorder %v15, 9
    %v190 = vsel %vm189, 1, 0
    %v191 = vcvt.s32.f32 %v190
    %192 = vadd.xlane.f32.xlu0 %v191
    %v193 = vpop.xlane.xlu0 %192
    %v194 = vrot.slane %v193, 4
    %v195 = vadd.f32 %v193, %v194
    %v196 = vrot.slane %v195, 2
    %v197 = vadd.f32 %v195, %v196
    %v198 = vrot.slane %v197, 1
    %v199 = vadd.f32 %v197, %v198
    %s200 = vtos %v199
    %v201 = vstv %s200
    %v202 = vmul.f32 %v201, %v17
    %204 = vst [vmem:[#allocation1] sm:$0xff] %v202
    %s205 = scalar_lea.vmem [#allocation1], 1
    %v206 = vld [vmem:[%s205] ss:$9 sm:$0xff]
    %v208 = vadd.f32 %v188, %v206
    %vm209 = vcmp.eq.s32.totalorder %v15, 10
    %v210 = vsel %vm209, 1, 0
    %v211 = vcvt.s32.f32 %v210
    %212 = vadd.xlane.f32.xlu0 %v211
    %v213 = vpop.xlane.xlu0 %212
    %v214 = vrot.slane %v213, 4
    %v215 = vadd.f32 %v213, %v214
    %v216 = vrot.slane %v215, 2
    %v217 = vadd.f32 %v215, %v216
    %v218 = vrot.slane %v217, 1
    %v219 = vadd.f32 %v217, %v218
    %s220 = vtos %v219
    %v221 = vstv %s220
    %v222 = vmul.f32 %v221, %v17
    %224 = vst [vmem:[#allocation1] sm:$0xff] %v222
    %s225 = scalar_lea.vmem [#allocation1], 2
    %v226 = vld [vmem:[%s225] ss:$9 sm:$0xff]
    %v228 = vadd.f32 %v208, %v226
    %vm229 = vcmp.eq.s32.totalorder %v15, 11
    %v230 = vsel %vm229, 1, 0
    %v231 = vcvt.s32.f32 %v230
    %232 = vadd.xlane.f32.xlu0 %v231
    %v233 = vpop.xlane.xlu0 %232
    %v234 = vrot.slane %v233, 4
    %v235 = vadd.f32 %v233, %v234
    %v236 = vrot.slane %v235, 2
    %v237 = vadd.f32 %v235, %v236
    %v238 = vrot.slane %v237, 1
    %v239 = vadd.f32 %v237, %v238
    %s240 = vtos %v239
    %v241 = vstv %s240
    %v242 = vmul.f32 %v241, %v17
    %244 = vst [vmem:[#allocation1] sm:$0xff] %v242
    %s245 = scalar_lea.vmem [#allocation1], 3
    %v246 = vld [vmem:[%s245] ss:$9 sm:$0xff]
    %v248 = vadd.f32 %v228, %v246
    %vm249 = vcmp.eq.s32.totalorder %v15, 12
    %v250 = vsel %vm249, 1, 0
    %v251 = vcvt.s32.f32 %v250
    %252 = vadd.xlane.f32.xlu0 %v251
    %v253 = vpop.xlane.xlu0 %252
    %v254 = vrot.slane %v253, 4
    %v255 = vadd.f32 %v253, %v254
    %v256 = vrot.slane %v255, 2
    %v257 = vadd.f32 %v255, %v256
    %v258 = vrot.slane %v257, 1
    %v259 = vadd.f32 %v257, %v258
    %s260 = vtos %v259
    %v261 = vstv %s260
    %v262 = vmul.f32 %v261, %v17
    %264 = vst [vmem:[#allocation1] sm:$0xff] %v262
    %s265 = scalar_lea.vmem [#allocation1], 4
    %v266 = vld [vmem:[%s265] ss:$9 sm:$0xff]
    %v268 = vadd.f32 %v248, %v266
    %vm269 = vcmp.eq.s32.totalorder %v15, 13
    %v270 = vsel %vm269, 1, 0
    %v271 = vcvt.s32.f32 %v270
    %272 = vadd.xlane.f32.xlu0 %v271
    %v273 = vpop.xlane.xlu0 %272
    %v274 = vrot.slane %v273, 4
    %v275 = vadd.f32 %v273, %v274
    %v276 = vrot.slane %v275, 2
    %v277 = vadd.f32 %v275, %v276
    %v278 = vrot.slane %v277, 1
    %v279 = vadd.f32 %v277, %v278
    %s280 = vtos %v279
    %v281 = vstv %s280
    %v282 = vmul.f32 %v281, %v17
    %284 = vst [vmem:[#allocation1] sm:$0xff] %v282
    %s285 = scalar_lea.vmem [#allocation1], 5
    %v286 = vld [vmem:[%s285] ss:$9 sm:$0xff]
    %v288 = vadd.f32 %v268, %v286
    %vm289 = vcmp.eq.s32.totalorder %v15, 14
    %v290 = vsel %vm289, 1, 0
    %v291 = vcvt.s32.f32 %v290
    %292 = vadd.xlane.f32.xlu0 %v291
    %v293 = vpop.xlane.xlu0 %292
    %v294 = vrot.slane %v293, 4
    %v295 = vadd.f32 %v293, %v294
    %v296 = vrot.slane %v295, 2
    %v297 = vadd.f32 %v295, %v296
    %v298 = vrot.slane %v297, 1
    %v299 = vadd.f32 %v297, %v298
    %s300 = vtos %v299
    %v301 = vstv %s300
    %v302 = vmul.f32 %v301, %v17
    %304 = vst [vmem:[#allocation1] sm:$0xff] %v302
    %s305 = scalar_lea.vmem [#allocation1], 6
    %v306 = vld [vmem:[%s305] ss:$9 sm:$0xff]
    %v308 = vadd.f32 %v288, %v306
    %vm309 = vcmp.eq.s32.totalorder %v15, 15
    %v310 = vsel %vm309, 1, 0
    %v311 = vcvt.s32.f32 %v310
    %312 = vadd.xlane.f32.xlu0 %v311
    %v313 = vpop.xlane.xlu0 %312
    %v314 = vrot.slane %v313, 4
    %v315 = vadd.f32 %v313, %v314
    %v316 = vrot.slane %v315, 2
    %v317 = vadd.f32 %v315, %v316
    %v318 = vrot.slane %v317, 1
    %v319 = vadd.f32 %v317, %v318
    %s320 = vtos %v319
    %v321 = vstv %s320
    %v322 = vmul.f32 %v321, %v17
    %324 = vst [vmem:[#allocation1] sm:$0xff] %v322
    %s325 = scalar_lea.vmem [#allocation1], 7
    %v326 = vld [vmem:[%s325] ss:$9 sm:$0xff]
    %v328 = vadd.f32 %v308, %v326
    %v329 = vmax.f32 %v328, 0.0
    %vm330 = vcmask 16384
    %331 = vst.msk [vmem:[#allocation2] sm:$0x1] %vm330, %v329
    // Predicated region
    $region14: #{tpu_custom_call.1} parent=1 // pred_check
      _
    $region15: #{tpu_custom_call.1} parent=1 // pred_check_branch
      %333 = sbr.rel (0) target = $region17
    $region16: #{tpu_custom_call.1} parent=1 // pred_region
      %335 = vsyncadd [#allocation3], 0
      %s337 = sshll.u32 [#allocation2], 4
      %s338 = int_to_ptr.vmem [resolvable:$true] %s337
      %s339 = sshll.u32 %s3, 4
      %s340 = int_to_ptr.hbm [resolvable:$true] %s339
      %342 = dma.vmem_to_hbm [thread:$0]  %s338, 16, %s340, [#allocation3]
    $region17: #{tpu_custom_call.1} parent=1 // pred_fallthru
      _
    // Predicated region
    $region18: #{tpu_custom_call.1} parent=1 // pred_check
      _
    $region19: #{tpu_custom_call.1} parent=1 // pred_check_branch
      %344 = sbr.rel (0) target = $region21
    $region20: #{tpu_custom_call.1} parent=1 // pred_region
      %346 = dma.done [#allocation3], 16
    $region21: #{tpu_custom_call.1} parent=1 // pred_fallthru
      _
    %347 = vsyncpa [#allocation3], 1

</llo_original>
